<compile_context>
chip_gen: v5e
topology: v5e:2x2
jax: 0.10.0
libtpu: 0.0.40
codegen_flags: <defaults>
</compile_context>

<pallas_src>
import functools

import jax
import jax.numpy as jnp
from jax.experimental import pallas as pl
from jax.experimental.pallas import tpu as pltpu


def _round_up(x, m):
    return ((x + m - 1) // m) * m


def _frn_kernel(x_ref, p_ref, o_ref, *, inv_hw):
    # x_ref: (RB, COLS_P); p_ref: (RB, 4) packed columns [gamma, beta, tau, |eps|]
    x = x_ref[...].astype(jnp.float32)
    # Sum of squares over the (zero-padded) lane axis, divided by the real H*W.
    nu2 = jnp.sum(x * x, axis=-1, keepdims=True) * inv_hw
    p = p_ref[...].astype(jnp.float32)
    gamma = p[:, 0:1]
    beta = p[:, 1:2]
    tau = p[:, 2:3]
    eps = p[:, 3:4]
    x_norm = x * jax.lax.rsqrt(nu2 + eps)
    y = jnp.maximum(gamma * x_norm + beta, tau)
    o_ref[...] = y.astype(o_ref.dtype)


@jax.jit
def filter_response_norm_2d(x, gamma, beta, tau, eps):
    """x: (N, C, H, W); gamma/beta/tau/eps: (1, C, 1, 1). Returns (N, C, H, W)."""
    n, c, h, w = x.shape
    rows, cols = n * c, h * w
    dtype_bytes = jnp.dtype(x.dtype).itemsize

    # Lane-dense columns: pad spatial dim to a multiple of 128 (zeros don't
    # perturb nu2 because we divide by the real H*W, not the padded width).
    cols_p = _round_up(cols, 128)

    # Row block sized so each x tile is ~2 MiB. With in+out double buffering
    # that's ~8 MiB of VMEM — safe on every generation (v7x has only 64 MiB).
    target_tile_bytes = 2 << 20
    rb = max(8, (target_tile_bytes // (cols_p * dtype_bytes)) // 8 * 8)
    if rows >= 16:
        # Keep the grid at >= 2 steps when possible so the single "parallel"
        # axis can shard across v7x's two TensorCores.
        rb = min(rb, _round_up(pl.cdiv(rows, 2), 8))
    rb = min(rb, _round_up(rows, 8))
    rows_p = _round_up(rows, rb)
    grid = (rows_p // rb,)

    # (N, C, H, W) -> (rows, cols), zero-padded to (rows_p, cols_p).
    x2d = x.reshape(rows, cols)
    if rows_p != rows or cols_p != cols:
        x2d = jnp.pad(x2d, ((0, rows_p - rows), (0, cols_p - cols)))

    # Pack per-row parameters into one (rows_p, 4) f32 slab (single DMA/step).
    def per_row(p):
        return jnp.broadcast_to(p.reshape(1, c), (n, c)).reshape(rows)

    params = jnp.stack(
        [per_row(gamma), per_row(beta), per_row(tau), jnp.abs(per_row(eps))],
        axis=-1,
    ).astype(jnp.float32)
    if rows_p != rows:
        # Pad with ones (nonzero eps) so padded rows stay finite; they are
        # sliced off below anyway.
        params = jnp.pad(params, ((0, rows_p - rows), (0, 0)), constant_values=1.0)

    x_spec = pl.BlockSpec((rb, cols_p), lambda i: (i, 0))
    p_spec = pl.BlockSpec((rb, 4), lambda i: (i, 0))

    tile_bytes = rb * cols_p * dtype_bytes
    vmem_needed = 4 * tile_bytes + 4 * rb * 4 * 4 + (2 << 20)
    vmem_limit = int(min(48 * 1024 * 1024, max(vmem_needed, 16 * 1024 * 1024)))

    out2d = pl.pallas_call(
        functools.partial(_frn_kernel, inv_hw=1.0 / float(cols)),
        out_shape=jax.ShapeDtypeStruct((rows_p, cols_p), x.dtype),
        grid_spec=pltpu.PrefetchScalarGridSpec(
            num_scalar_prefetch=0,
            grid=grid,
            in_specs=[x_spec, p_spec],
            out_specs=x_spec,
        ),
        compiler_params=pltpu.CompilerParams(
            dimension_semantics=("parallel",),
            vmem_limit_bytes=vmem_limit,
        ),
        cost_estimate=pl.CostEstimate(
            flops=5 * rows * cols,
            transcendentals=rows,
            bytes_accessed=2 * rows_p * cols_p * dtype_bytes + rows_p * 16,
        ),
    )(x2d, params)

    return out2d[:rows, :cols].reshape(n, c, h, w)


def frn_reference(x, gamma, beta, tau, eps):
    nu2 = jnp.mean(x.astype(jnp.float32) ** 2, axis=(2, 3), keepdims=True)
    xn = x * jax.lax.rsqrt(nu2 + jnp.abs(eps))
    return jnp.maximum(gamma * xn + beta, tau).astype(x.dtype)


if __name__ == "__main__":
    key = jax.random.PRNGKey(0)
    N, C, H, W = 2, 4, 16, 16

    x = jax.random.normal(key, (N, C, H, W), dtype=jnp.float32)

    # Deterministic parameter init matching reset_parameters():
    # gamma = beta = tau = 1; eps = 1e-6 (non-learnable by default).
    shape = (1, C, 1, 1)
    gamma = jnp.ones(shape, jnp.float32)
    beta = jnp.ones(shape, jnp.float32)
    tau = jnp.ones(shape, jnp.float32)
    eps = jnp.full(shape, 1e-6, jnp.float32)

    out = filter_response_norm_2d(x, gamma, beta, tau, eps)
    out = jax.block_until_ready(out)

    ref = frn_reference(x, gamma, beta, tau, eps)
    assert out.shape == (N, C, H, W)
    assert jnp.allclose(out, ref, atol=1e-5, rtol=1e-5), "mismatch vs reference"

    print("KERNEL_OK")
</pallas_src>

<mosaic_0001>
module attributes {stable_mosaic.version = 11 : i64} {
  func.func @_frn_kernel(%arg0: i32, %arg1: memref<8x256xf32, #tpu.memory_space<vmem>>, %arg2: memref<8x4xf32, #tpu.memory_space<vmem>>, %arg3: memref<8x256xf32, #tpu.memory_space<vmem>>) attributes {dimension_semantics = [#tpu.dimension_semantics<parallel>], iteration_bounds = array<i64: 1>, scalar_prefetch = 0 : i64, scratch_operands = 0 : i64, tpu.core_type = #tpu.core_type<tc>, window_params = [{transform_indices = @transform_0, window_bounds = array<i64: 8, 256>}, {transform_indices = @transform_1, window_bounds = array<i64: 8, 4>}, {transform_indices = @transform_2, window_bounds = array<i64: 8, 256>}]} {
    %c0 = arith.constant 0 : index
    %c0_0 = arith.constant 0 : index
    %0 = vector.load %arg1[%c0, %c0_0] : memref<8x256xf32, #tpu.memory_space<vmem>>, vector<8x256xf32>
    %1 = arith.mulf %0, %0 : vector<8x256xf32>
    %cst = arith.constant dense<0.000000e+00> : vector<8xf32>
    %2 = vector.multi_reduction <add>, %1, %cst [1] : vector<8x256xf32> to vector<8xf32>
    %3 = vector.shape_cast %2 : vector<8xf32> to vector<8x1xf32>
    %cst_1 = arith.constant 3.906250e-03 : f32
    %4 = vector.broadcast %cst_1 : f32 to vector<8x1xf32>
    %5 = arith.mulf %3, %4 : vector<8x1xf32>
    %c0_2 = arith.constant 0 : index
    %c0_3 = arith.constant 0 : index
    %6 = vector.load %arg2[%c0_2, %c0_3] : memref<8x4xf32, #tpu.memory_space<vmem>>, vector<8x4xf32>
    %7 = vector.extract_strided_slice %6 {offsets = [0, 0], sizes = [8, 1], strides = [1, 1]} : vector<8x4xf32> to vector<8x1xf32>
    %8 = vector.extract_strided_slice %6 {offsets = [0, 1], sizes = [8, 1], strides = [1, 1]} : vector<8x4xf32> to vector<8x1xf32>
    %9 = vector.extract_strided_slice %6 {offsets = [0, 2], sizes = [8, 1], strides = [1, 1]} : vector<8x4xf32> to vector<8x1xf32>
    %10 = vector.extract_strided_slice %6 {offsets = [0, 3], sizes = [8, 1], strides = [1, 1]} : vector<8x4xf32> to vector<8x1xf32>
    %11 = arith.addf %5, %10 : vector<8x1xf32>
    %12 = math.rsqrt %11 : vector<8x1xf32>
    %13 = vector.broadcast %12 : vector<8x1xf32> to vector<8x256xf32>
    %14 = arith.mulf %0, %13 : vector<8x256xf32>
    %15 = vector.broadcast %7 : vector<8x1xf32> to vector<8x256xf32>
    %16 = arith.mulf %15, %14 : vector<8x256xf32>
    %17 = vector.broadcast %8 : vector<8x1xf32> to vector<8x256xf32>
    %18 = arith.addf %16, %17 : vector<8x256xf32>
    %19 = vector.broadcast %9 : vector<8x1xf32> to vector<8x256xf32>
    %20 = arith.maximumf %18, %19 : vector<8x256xf32>
    %c0_4 = arith.constant 0 : index
    %c0_5 = arith.constant 0 : index
    %21 = vector.load %arg3[%c0_4, %c0_5] : memref<8x256xf32, #tpu.memory_space<vmem>>, vector<8x256xf32>
    tpu.vector_store %arg3[%c0_4, %c0_5], %20 {strides = array<i32>} : memref<8x256xf32, #tpu.memory_space<vmem>>, vector<8x256xf32>,
    return
  }
  func.func @transform_0(%arg0: i32) -> (i32, i32) {
    %c0_i32 = arith.constant 0 : i32
    %c0_i32_0 = arith.constant 0 : i32
    return %arg0, %c0_i32 : i32, i32
  }
  func.func @transform_1(%arg0: i32) -> (i32, i32) {
    %c0_i32 = arith.constant 0 : i32
    %c0_i32_0 = arith.constant 0 : i32
    return %arg0, %c0_i32 : i32, i32
  }
  func.func @transform_2(%arg0: i32) -> (i32, i32) {
    %c0_i32 = arith.constant 0 : i32
    %c0_i32_0 = arith.constant 0 : i32
    return %arg0, %c0_i32 : i32, i32
  }
}

</mosaic_0001>

<llo_original>
// kernel: filter_response_norm_2d.1
$region0: #{filter_response_norm_2d.1}
  #allocation0 [shape = 'u32[]', space=smem, size = 0x4, offset = 0x4, fixed_abs, tag = 'smem constant byte address 0x4 - core index']
  #allocation1 [shape = 'u32[72,128]{1,0:T(1,128)}', space=vmem, size = 0x9000, scoped, tag = 'internal scratch']
  %s0 = inlined_call_operand.vmem [shape: f32[8,256], index: 0, kind: input, shape index: {}]
  %s1 = inlined_call_operand.vmem [shape: f32[8,4], index: 1, kind: input, shape index: {}]
  %s2 = inlined_call_operand.vmem [shape: f32[8,256], index: 2, kind: output, shape index: {}]
  %s3 = sld [smem:[#allocation0]]
  $region18: #{filter_response_norm_2d.1} parent=0
    _
  %s5 = ssub.s32 1, %s3
  %s6 = scalar_select 0, %s5, %s3
  // Predicated region
  $region2: #{filter_response_norm_2d.1} parent=0 // pred_check
    _
  $region3: #{filter_response_norm_2d.1} parent=0 // pred_check_branch
    %8 = sbr.rel (0) target = $region5
  $region4: #{filter_response_norm_2d.1} parent=0 // pred_region
    _
  $region5: #{filter_response_norm_2d.1} parent=0 // pred_fallthru
    _
  // Predicated region
  $region6: #{filter_response_norm_2d.1} parent=0 // pred_check
    _
  $region7: #{filter_response_norm_2d.1} parent=0 // pred_check_branch
    %10 = sbr.rel (0) target = $region9
  $region8: #{filter_response_norm_2d.1} parent=0 // pred_region
    _
  $region9: #{filter_response_norm_2d.1} parent=0 // pred_fallthru
    _
  %v11 = vld [vmem:[%s0] sm:$0xff]
  %v12 = vld [vmem:[%s0 + $0x8] sm:$0xff]
  %v13 = vmul.f32 %v11, %v11
  %v14 = vmul.f32 %v12, %v12
  %v15 = vadd.f32 %v13, %v14
  %16 = vadd.xlane.f32.xlu0 %v15
  %v17 = vpop.xlane.xlu0 %16
  %v18 = vmul.f32 %v17, 0.00390625
  %v19 = vld [vmem:[%s1] sm:$0xff]
  %v20 = vadd.f32 %v18, %v19
  %v21 = vrsqrt.pop %v20
  %v22 = vmul.f32 %v21, %v20
  %v23 = vmul.f32 %v22, %v21
  %v24 = vmul.f32 0.5, %v23
  %v25 = vsub.f32 1.5, %v24
  %v26 = vmul.f32 %v21, %v25
  %vm27 = vweird.f32 %v20
  %vm28 = vweird.f32 %v21
  %vm29 = vmor %vm27, %vm28
  %v30 = vsel %vm29, %v21, %v26
  %32 = vset.pattern.permute.xlu0 3
  %33 = vperm.xlu0 %32, %v30
  %v34 = vpop.permute.xlu0 %33
  %v36 = vmul.f32 %v11, %v34
  %v37 = vmul.f32 %v12, %v34
  %39 = vset.pattern.permute.xlu0 0
  %40 = vperm.xlu0 %39, %v19
  %v41 = vpop.permute.xlu0 %40
  %v43 = vmul.f32 %v41, %v36
  %v44 = vmul.f32 %v41, %v37
  %45 = vset.pattern.permute.xlu0 1
  %46 = vperm.xlu0 %45, %v19
  %v47 = vpop.permute.xlu0 %46
  %v49 = vadd.f32 %v43, %v47
  %v50 = vadd.f32 %v44, %v47
  %51 = vset.pattern.permute.xlu0 2
  %52 = vperm.xlu0 %51, %v19
  %v53 = vpop.permute.xlu0 %52
  %v55 = vmax.f32 %v49, %v53
  %v56 = vmax.f32 %v50, %v53
  %57 = vst [vmem:[%s2] sm:$0xff] %v55
  %58 = vst [vmem:[%s2 + $0x8] sm:$0xff] %v56
  // Predicated region
  $region10: #{filter_response_norm_2d.1} parent=0 // pred_check
    _
  $region11: #{filter_response_norm_2d.1} parent=0 // pred_check_branch
    %60 = sbr.rel (0) target = $region13
  $region12: #{filter_response_norm_2d.1} parent=0 // pred_region
    _
  $region13: #{filter_response_norm_2d.1} parent=0 // pred_fallthru
    _
  // Predicated region
  $region14: #{filter_response_norm_2d.1} parent=0 // pred_check
    _
  $region15: #{filter_response_norm_2d.1} parent=0 // pred_check_branch
    %62 = sbr.rel (0) target = $region17
  $region16: #{filter_response_norm_2d.1} parent=0 // pred_region
    _
  $region17: #{filter_response_norm_2d.1} parent=0 // pred_fallthru
    _

</llo_original>
